<compile_context>
chip_gen: v6e
topology: v6e:2x2x1
jax: 0.10.0
libtpu: 0.0.40
codegen_flags: <defaults>
</compile_context>

<pallas_src>
import functools

import jax
import jax.numpy as jnp
from jax import lax
from jax.experimental import pallas as pl
from jax.experimental.pallas import tpu as pltpu


def _round_up(x, m):
    return ((x + m - 1) // m) * m


# --------------------------------------------------------------------------- #
# Kernel
# --------------------------------------------------------------------------- #
def _a2c_kernel(num_action, num_sign, actor_cols, value_col,
                state_ref, w1_ref, b1_ref, w2_ref, b2_ref, wh_ref, bh_ref,
                actor_ref, value_ref):
    """One batch tile: trunk (2 matmuls) + fused head matmul + activations."""
    cdt = w1_ref.dtype                      # compute dtype for MXU (f32 or bf16)
    x = state_ref[...].astype(cdt)

    # Shared trunk (actor.hidden / actor.hidden2, reused by the critic).
    h1 = jnp.dot(x, w1_ref[...], preferred_element_type=jnp.float32) + b1_ref[...]
    h1 = jnp.maximum(h1, 0.0)
    h2 = jnp.dot(h1.astype(cdt), w2_ref[...],
                 preferred_element_type=jnp.float32) + b2_ref[...]
    h2 = jnp.maximum(h2, 0.0)

    # Fused head matmul: columns [policy | sign | volas | value | zero-pad].
    z = jnp.dot(h2.astype(cdt), wh_ref[...],
                preferred_element_type=jnp.float32) + bh_ref[...]

    # Column masks built once at (1, head_pad); selects broadcast over sublanes.
    head_pad = z.shape[-1]
    col = lax.broadcasted_iota(jnp.int32, (1, head_pad), dimension=1)
    is_policy = col < num_action
    is_sign = jnp.logical_and(col >= num_action, col < num_action + num_sign)

    # Numerically-stable softmax over the policy columns only.
    # Non-policy columns are masked to -inf BEFORE the exp so no inf is produced.
    neg_inf = jnp.float32(-jnp.inf)
    z_pol = jnp.where(is_policy, z, neg_inf)
    m = jnp.max(z_pol, axis=-1, keepdims=True)
    e = jnp.exp(z_pol - m)                              # 0 for non-policy cols
    denom = jnp.sum(e, axis=-1, keepdims=True)
    probs = e / denom                                   # exact: probs sum to 1

    sign_act = jnp.tanh(10.0 * z)                       # 'sign' head activation
    lrelu = jnp.where(z >= 0.0, z, 0.01 * z)            # 'volas' head activation

    combined = jnp.where(is_policy, probs,
               jnp.where(is_sign, sign_act, lrelu))

    # Narrow stores: only the real actor columns and the single critic column
    # ever touch HBM (the zero-padded head lanes never leave VMEM).
    actor_ref[...] = combined[:, :actor_cols].astype(actor_ref.dtype)
    value_ref[...] = z[:, value_col:value_col + 1].astype(value_ref.dtype)


# --------------------------------------------------------------------------- #
# Wrapper
# --------------------------------------------------------------------------- #
def fold_head_params(params, *, compute_dtype=jnp.float32, head_pad=128):
    """Pre-fold (once, outside the forward path) the policy / additional-task /
    critic head weights into a single lane-dense (128, head_pad) matrix.
    Column order is [policy | sign | volas | value]; padding MUST stay zero
    (the kernel relies on the column order, though padded lanes are never
    stored)."""
    wh = jnp.concatenate([params["wout"], params["wadd"], params["wv"]], axis=1)
    bh = jnp.concatenate([params["bout"], params["badd"], params["bv"]], axis=1)
    out_cols = wh.shape[1]
    head_pad = max(head_pad, _round_up(out_cols, 128))
    pad = head_pad - out_cols
    wh = jnp.pad(wh, ((0, 0), (0, pad)))
    bh = jnp.pad(bh, ((0, 0), (0, pad)))
    return dict(
        w1=params["w1"].astype(compute_dtype), b1=params["b1"].astype(jnp.float32),
        w2=params["w2"].astype(compute_dtype), b2=params["b2"].astype(jnp.float32),
        wh=wh.astype(compute_dtype), bh=bh.astype(jnp.float32),
    )


def _choose_batch_tile(B, block_b):
    """Batch tile: multiple of 8; big tiles amortize per-step overhead; split a
    single-tile grid in two (when large enough) so both v7x TCs get work."""
    B8 = _round_up(B, 8)
    if B8 <= block_b:
        if B8 >= 512:                       # big enough that 2 grid steps pay off
            return _round_up(-(-B8 // 2), 8)
        return B8
    return block_b


def multitask_a2c_forward(state, fused, *, num_action, num_sign, dim,
                          block_b=1024):
    """Runs the fused A2C forward. Returns (y_actor, y_value)."""
    assert num_action >= 1, "softmax over zero policy columns is undefined"
    B, num_state = state.shape
    hidden = fused["w1"].shape[1]
    head_pad = fused["wh"].shape[1]
    actor_cols = num_action + num_sign + dim
    value_col = actor_cols                              # critic column follows actor cols

    TB = _choose_batch_tile(B, block_b)
    B_pad = _round_up(B, TB)
    if B_pad != B:
        state = jnp.pad(state, ((0, B_pad - B), (0, 0)))
    grid = (B_pad // TB,)

    kernel = functools.partial(_a2c_kernel, num_action, num_sign,
                               actor_cols, value_col)

    const = lambda i: (0, 0)                            # weights stay VMEM-resident
    out_actor, out_value = pl.pallas_call(
        kernel,
        out_shape=(jax.ShapeDtypeStruct((B_pad, actor_cols), jnp.float32),
                   jax.ShapeDtypeStruct((B_pad, 1), jnp.float32)),
        grid_spec=pltpu.PrefetchScalarGridSpec(
            num_scalar_prefetch=0,
            grid=grid,
            in_specs=[
                pl.BlockSpec((TB, num_state), lambda i: (i, 0)),   # state tile
                pl.BlockSpec((num_state, hidden), const),          # w1
                pl.BlockSpec((1, hidden), const),                  # b1
                pl.BlockSpec((hidden, hidden), const),             # w2
                pl.BlockSpec((1, hidden), const),                  # b2
                pl.BlockSpec((hidden, head_pad), const),           # fused head W
                pl.BlockSpec((1, head_pad), const),                # fused head b
            ],
            out_specs=[
                pl.BlockSpec((TB, actor_cols), lambda i: (i, 0)),  # y_actor
                pl.BlockSpec((TB, 1), lambda i: (i, 0)),           # y_value
            ],
        ),
        compiler_params=pltpu.CompilerParams(
            dimension_semantics=("parallel",),          # megacore on v7x
            vmem_limit_bytes=32 * 1024 * 1024,          # safe on v7x's 64 MiB VMEM
        ),
    )(state, fused["w1"], fused["b1"], fused["w2"], fused["b2"],
      fused["wh"], fused["bh"])

    if B_pad != B:
        out_actor = out_actor[:B]
        out_value = out_value[:B]
    return out_actor, out_value


# --------------------------------------------------------------------------- #
# Init + pure-JAX reference (mirrors the PyTorch module)
# --------------------------------------------------------------------------- #
def init_params(key, num_state, num_action, num_add):
    """PyTorch-default-style init: U(-1/sqrt(fan_in), 1/sqrt(fan_in)).
    Linear weights stored transposed as (in_features, out_features)."""
    def linear(k, fan_in, fan_out):
        kw, kb = jax.random.split(k)
        bound = 1.0 / (fan_in ** 0.5)
        w = jax.random.uniform(kw, (fan_in, fan_out), jnp.float32, -bound, bound)
        b = jax.random.uniform(kb, (1, fan_out), jnp.float32, -bound, bound)
        return w, b

    k1, k2, k3, k4, k5 = jax.random.split(key, 5)
    w1, b1 = linear(k1, num_state, 128)        # actor.hidden
    w2, b2 = linear(k2, 128, 128)              # actor.hidden2
    wout, bout = linear(k3, 128, num_action)   # actor.output
    wadd, badd = linear(k4, 128, num_add)      # actor.additional_outputs (stacked)
    wv, bv = linear(k5, 128, 1)                # critic's final Linear(128, 1)
    return dict(w1=w1, b1=b1, w2=w2, b2=b2, wout=wout, bout=bout,
                wadd=wadd, badd=badd, wv=wv, bv=bv)


def reference_forward(state, params, *, num_action, num_sign, dim):
    h1 = jnp.maximum(state @ params["w1"] + params["b1"], 0.0)
    h2 = jnp.maximum(h1 @ params["w2"] + params["b2"], 0.0)
    logits = h2 @ params["wout"] + params["bout"]
    probs = jax.nn.softmax(logits, axis=-1)
    add = h2 @ params["wadd"] + params["badd"]
    sign_part = jnp.tanh(10.0 * add[:, :num_sign])
    volas_part = jnp.where(add[:, num_sign:] >= 0.0,
                           add[:, num_sign:], 0.01 * add[:, num_sign:])
    y_actor = jnp.concatenate([probs, sign_part, volas_part], axis=-1)
    y_value = h2 @ params["wv"] + params["bv"]
    return y_actor, y_value


# --------------------------------------------------------------------------- #
if __name__ == "__main__":
    # Multitask_A2C_Net(dim=2, num_state=16, num_action=4, add_tasks=['sign','volas'])
    dim = 2
    num_state = 16
    num_action = 4
    num_sign = 1                  # 'sign' adds 1 head
    num_add = num_sign + dim      # 'volas' adds `dim` heads
    batch = 8

    key = jax.random.PRNGKey(0)
    k_params, k_state, k_state_mid, k_state_big = jax.random.split(key, 4)
    params = init_params(k_params, num_state, num_action, num_add)
    state = jax.random.normal(k_state, (batch, num_state), dtype=jnp.float32)

    # ---- f32 path (exact semantics check, single small tile) ------------- #
    fused_f32 = fold_head_params(params, compute_dtype=jnp.float32)
    y_actor, y_value = multitask_a2c_forward(
        state, fused_f32, num_action=num_action, num_sign=num_sign, dim=dim)
    jax.block_until_ready((y_actor, y_value))

    ref_actor, ref_value = reference_forward(
        state, params, num_action=num_action, num_sign=num_sign, dim=dim)
    assert y_actor.shape == (batch, num_action + num_add)
    assert y_value.shape == (batch, 1)
    assert jnp.allclose(y_actor, ref_actor, atol=1e-3, rtol=1e-3)
    assert jnp.allclose(y_value, ref_value, atol=1e-4, rtol=1e-4)
    # Exact softmax: probabilities sum to 1.
    assert jnp.allclose(jnp.sum(y_actor[:, :num_action], axis=-1), 1.0, atol=1e-5)

    # ---- single-tile batch that auto-splits into 2 tiles (v7x megacore) -- #
    mid_batch = 512
    state_mid = jax.random.normal(k_state_mid, (mid_batch, num_state), jnp.float32)
    ym_actor, ym_value = multitask_a2c_forward(
        state_mid, fused_f32, num_action=num_action, num_sign=num_sign, dim=dim)
    jax.block_until_ready((ym_actor, ym_value))
    rm_actor, rm_value = reference_forward(
        state_mid, params, num_action=num_action, num_sign=num_sign, dim=dim)
    assert jnp.allclose(ym_actor, rm_actor, atol=1e-3, rtol=1e-3)
    assert jnp.allclose(ym_value, rm_value, atol=1e-4, rtol=1e-4)

    # ---- gridded / remainder path (batch not a multiple of the tile) ----- #
    big_batch = 1000
    state_big = jax.random.normal(k_state_big, (big_batch, num_state), jnp.float32)
    yb_actor, yb_value = multitask_a2c_forward(
        state_big, fused_f32, num_action=num_action, num_sign=num_sign, dim=dim,
        block_b=256)
    jax.block_until_ready((yb_actor, yb_value))
    rb_actor, rb_value = reference_forward(
        state_big, params, num_action=num_action, num_sign=num_sign, dim=dim)
    assert yb_actor.shape == (big_batch, num_action + num_add)
    assert yb_value.shape == (big_batch, 1)
    assert jnp.allclose(yb_actor, rb_actor, atol=1e-3, rtol=1e-3)
    assert jnp.allclose(yb_value, rb_value, atol=1e-4, rtol=1e-4)

    # ---- bf16 MXU path (v6e / v7x fast path; f32 recommended on v5e) ----- #
    fused_bf16 = fold_head_params(params, compute_dtype=jnp.bfloat16)
    yh_actor, yh_value = multitask_a2c_forward(
        state, fused_bf16, num_action=num_action, num_sign=num_sign, dim=dim)
    jax.block_until_ready((yh_actor, yh_value))
    assert yh_actor.shape == (batch, num_action + num_add)
    assert yh_value.shape == (batch, 1)
    assert bool(jnp.all(jnp.isfinite(yh_actor))) and bool(jnp.all(jnp.isfinite(yh_value)))
    assert jnp.allclose(jnp.sum(yh_actor[:, :num_action], axis=-1), 1.0, atol=2e-2)

    print("KERNEL_OK")
</pallas_src>

<mosaic_0001>
module attributes {stable_mosaic.version = 11 : i64} {
  func.func @_a2c_kernel(%arg0: i32, %arg1: memref<8x16xf32, #tpu.memory_space<vmem>>, %arg2: memref<16x128xf32, #tpu.memory_space<vmem>>, %arg3: memref<1x128xf32, #tpu.memory_space<vmem>>, %arg4: memref<128x128xf32, #tpu.memory_space<vmem>>, %arg5: memref<1x128xf32, #tpu.memory_space<vmem>>, %arg6: memref<128x128xf32, #tpu.memory_space<vmem>>, %arg7: memref<1x128xf32, #tpu.memory_space<vmem>>, %arg8: memref<8x7xf32, #tpu.memory_space<vmem>>, %arg9: memref<8x1xf32, #tpu.memory_space<vmem>>) attributes {dimension_semantics = [#tpu.dimension_semantics<parallel>], iteration_bounds = array<i64: 1>, scalar_prefetch = 0 : i64, scratch_operands = 0 : i64, tpu.core_type = #tpu.core_type<tc>, window_params = [{transform_indices = @transform_0, window_bounds = array<i64: 8, 16>}, {pipeline_mode = #tpu.pipeline_mode<synchronous>, transform_indices = @transform_1, window_bounds = array<i64: 16, 128>}, {pipeline_mode = #tpu.pipeline_mode<synchronous>, transform_indices = @transform_2, window_bounds = array<i64: 1, 128>}, {pipeline_mode = #tpu.pipeline_mode<synchronous>, transform_indices = @transform_3, window_bounds = array<i64: 128, 128>}, {pipeline_mode = #tpu.pipeline_mode<synchronous>, transform_indices = @transform_4, window_bounds = array<i64: 1, 128>}, {pipeline_mode = #tpu.pipeline_mode<synchronous>, transform_indices = @transform_5, window_bounds = array<i64: 128, 128>}, {pipeline_mode = #tpu.pipeline_mode<synchronous>, transform_indices = @transform_6, window_bounds = array<i64: 1, 128>}, {transform_indices = @transform_7, window_bounds = array<i64: 8, 7>}, {transform_indices = @transform_8, window_bounds = array<i64: 8, 1>}]} {
    %c0 = arith.constant 0 : index
    %c0_0 = arith.constant 0 : index
    %0 = vector.load %arg1[%c0, %c0_0] : memref<8x16xf32, #tpu.memory_space<vmem>>, vector<8x16xf32>
    %c0_1 = arith.constant 0 : index
    %c0_2 = arith.constant 0 : index
    %1 = vector.load %arg2[%c0_1, %c0_2] : memref<16x128xf32, #tpu.memory_space<vmem>>, vector<16x128xf32>
    %cst = arith.constant dense<0.000000e+00> : vector<8x128xf32>
    %2 = tpu.matmul %0, %1, %cst {dimension_numbers = #tpu.dot_dimension_numbers<[1], [0], [0], [1], [0, 0, 1, 1], [], []>} : vector<8x16xf32>, vector<16x128xf32>, vector<8x128xf32> -> vector<8x128xf32>
    %c0_3 = arith.constant 0 : index
    %c0_4 = arith.constant 0 : index
    %3 = vector.load %arg3[%c0_3, %c0_4] : memref<1x128xf32, #tpu.memory_space<vmem>>, vector<1x128xf32>
    %4 = vector.broadcast %3 : vector<1x128xf32> to vector<8x128xf32>
    %5 = arith.addf %2, %4 : vector<8x128xf32>
    %cst_5 = arith.constant 0.000000e+00 : f32
    %6 = vector.broadcast %cst_5 : f32 to vector<8x128xf32>
    %7 = arith.maximumf %5, %6 : vector<8x128xf32>
    %c0_6 = arith.constant 0 : index
    %c0_7 = arith.constant 0 : index
    %8 = vector.load %arg4[%c0_6, %c0_7] : memref<128x128xf32, #tpu.memory_space<vmem>>, vector<128x128xf32>
    %cst_8 = arith.constant dense<0.000000e+00> : vector<8x128xf32>
    %9 = tpu.matmul %7, %8, %cst_8 {dimension_numbers = #tpu.dot_dimension_numbers<[1], [0], [0], [1], [0, 0, 1, 1], [], []>} : vector<8x128xf32>, vector<128x128xf32>, vector<8x128xf32> -> vector<8x128xf32>
    %c0_9 = arith.constant 0 : index
    %c0_10 = arith.constant 0 : index
    %10 = vector.load %arg5[%c0_9, %c0_10] : memref<1x128xf32, #tpu.memory_space<vmem>>, vector<1x128xf32>
    %11 = vector.broadcast %10 : vector<1x128xf32> to vector<8x128xf32>
    %12 = arith.addf %9, %11 : vector<8x128xf32>
    %cst_11 = arith.constant 0.000000e+00 : f32
    %13 = vector.broadcast %cst_11 : f32 to vector<8x128xf32>
    %14 = arith.maximumf %12, %13 : vector<8x128xf32>
    %c0_12 = arith.constant 0 : index
    %c0_13 = arith.constant 0 : index
    %15 = vector.load %arg6[%c0_12, %c0_13] : memref<128x128xf32, #tpu.memory_space<vmem>>, vector<128x128xf32>
    %cst_14 = arith.constant dense<0.000000e+00> : vector<8x128xf32>
    %16 = tpu.matmul %14, %15, %cst_14 {dimension_numbers = #tpu.dot_dimension_numbers<[1], [0], [0], [1], [0, 0, 1, 1], [], []>} : vector<8x128xf32>, vector<128x128xf32>, vector<8x128xf32> -> vector<8x128xf32>
    %c0_15 = arith.constant 0 : index
    %c0_16 = arith.constant 0 : index
    %17 = vector.load %arg7[%c0_15, %c0_16] : memref<1x128xf32, #tpu.memory_space<vmem>>, vector<1x128xf32>
    %18 = vector.broadcast %17 : vector<1x128xf32> to vector<8x128xf32>
    %19 = arith.addf %16, %18 : vector<8x128xf32>
    %20 = tpu.iota {dimensions = array<i32: 1>} : vector<1x128xi32>
    %c4_i32 = arith.constant 4 : i32
    %21 = vector.broadcast %c4_i32 : i32 to vector<1x128xi32>
    %22 = arith.cmpi slt, %20, %21 : vector<1x128xi32>
    %c4_i32_17 = arith.constant 4 : i32
    %23 = vector.broadcast %c4_i32_17 : i32 to vector<1x128xi32>
    %24 = arith.cmpi sge, %20, %23 : vector<1x128xi32>
    %c5_i32 = arith.constant 5 : i32
    %25 = vector.broadcast %c5_i32 : i32 to vector<1x128xi32>
    %26 = arith.cmpi slt, %20, %25 : vector<1x128xi32>
    %27 = arith.andi %24, %26 : vector<1x128xi1>
    %cst_18 = arith.constant 0xFF800000 : f32
    %28 = vector.shape_cast %22 : vector<1x128xi1> to vector<1x128xi1>
    %29 = vector.broadcast %28 : vector<1x128xi1> to vector<8x128xi1>
    %30 = vector.broadcast %cst_18 : f32 to vector<8x128xf32>
    %31 = arith.select %29, %19, %30 : vector<8x128xi1>, vector<8x128xf32>
    %cst_19 = arith.constant dense<0xFF800000> : vector<8xf32>
    %32 = vector.multi_reduction <maximumf>, %31, %cst_19 [1] : vector<8x128xf32> to vector<8xf32>
    %33 = vector.shape_cast %32 : vector<8xf32> to vector<8x1xf32>
    %34 = vector.broadcast %33 : vector<8x1xf32> to vector<8x128xf32>
    %35 = arith.subf %31, %34 : vector<8x128xf32>
    %36 = math.exp %35 : vector<8x128xf32>
    %cst_20 = arith.constant dense<0.000000e+00> : vector<8xf32>
    %37 = vector.multi_reduction <add>, %36, %cst_20 [1] : vector<8x128xf32> to vector<8xf32>
    %38 = vector.shape_cast %37 : vector<8xf32> to vector<8x1xf32>
    %39 = vector.broadcast %38 : vector<8x1xf32> to vector<8x128xf32>
    %40 = arith.divf %36, %39 : vector<8x128xf32>
    %cst_21 = arith.constant 1.000000e+01 : f32
    %41 = vector.broadcast %cst_21 : f32 to vector<8x128xf32>
    %42 = arith.mulf %41, %19 : vector<8x128xf32>
    %43 = math.tanh %42 : vector<8x128xf32>
    %cst_22 = arith.constant 0.000000e+00 : f32
    %44 = vector.broadcast %cst_22 : f32 to vector<8x128xf32>
    %45 = arith.cmpf oge, %19, %44 : vector<8x128xf32>
    %cst_23 = arith.constant 0.00999999977 : f32
    %46 = vector.broadcast %cst_23 : f32 to vector<8x128xf32>
    %47 = arith.mulf %46, %19 : vector<8x128xf32>
    %48 = arith.select %45, %19, %47 : vector<8x128xi1>, vector<8x128xf32>
    %49 = vector.shape_cast %27 : vector<1x128xi1> to vector<1x128xi1>
    %50 = vector.broadcast %49 : vector<1x128xi1> to vector<8x128xi1>
    %51 = arith.select %50, %43, %48 : vector<8x128xi1>, vector<8x128xf32>
    %52 = vector.shape_cast %22 : vector<1x128xi1> to vector<1x128xi1>
    %53 = vector.broadcast %52 : vector<1x128xi1> to vector<8x128xi1>
    %54 = arith.select %53, %40, %51 : vector<8x128xi1>, vector<8x128xf32>
    %55 = vector.extract_strided_slice %54 {offsets = [0, 0], sizes = [8, 7], strides = [1, 1]} : vector<8x128xf32> to vector<8x7xf32>
    %c0_24 = arith.constant 0 : index
    %c0_25 = arith.constant 0 : index
    %56 = vector.load %arg8[%c0_24, %c0_25] : memref<8x7xf32, #tpu.memory_space<vmem>>, vector<8x7xf32>
    tpu.vector_store %arg8[%c0_24, %c0_25], %55 {strides = array<i32>} : memref<8x7xf32, #tpu.memory_space<vmem>>, vector<8x7xf32>,
    %57 = vector.extract_strided_slice %19 {offsets = [0, 7], sizes = [8, 1], strides = [1, 1]} : vector<8x128xf32> to vector<8x1xf32>
    %c0_26 = arith.constant 0 : index
    %c0_27 = arith.constant 0 : index
    %58 = vector.load %arg9[%c0_26, %c0_27] : memref<8x1xf32, #tpu.memory_space<vmem>>, vector<8x1xf32>
    tpu.vector_store %arg9[%c0_26, %c0_27], %57 {strides = array<i32>} : memref<8x1xf32, #tpu.memory_space<vmem>>, vector<8x1xf32>,
    return
  }
  func.func @transform_0(%arg0: i32) -> (i32, i32) {
    %c0_i32 = arith.constant 0 : i32
    %c0_i32_0 = arith.constant 0 : i32
    return %arg0, %c0_i32 : i32, i32
  }
  func.func @transform_1(%arg0: i32) -> (i32, i32) {
    %c0_i32 = arith.constant 0 : i32
    %c0_i32_0 = arith.constant 0 : i32
    %c0_i32_1 = arith.constant 0 : i32
    return %c0_i32, %c0_i32_0 : i32, i32
  }
  func.func @transform_2(%arg0: i32) -> (i32, i32) {
    %c0_i32 = arith.constant 0 : i32
    %c0_i32_0 = arith.constant 0 : i32
    %c0_i32_1 = arith.constant 0 : i32
    return %c0_i32, %c0_i32_0 : i32, i32
  }
  func.func @transform_3(%arg0: i32) -> (i32, i32) {
    %c0_i32 = arith.constant 0 : i32
    %c0_i32_0 = arith.constant 0 : i32
    %c0_i32_1 = arith.constant 0 : i32
    return %c0_i32, %c0_i32_0 : i32, i32
  }
  func.func @transform_4(%arg0: i32) -> (i32, i32) {
    %c0_i32 = arith.constant 0 : i32
    %c0_i32_0 = arith.constant 0 : i32
    %c0_i32_1 = arith.constant 0 : i32
    return %c0_i32, %c0_i32_0 : i32, i32
  }
  func.func @transform_5(%arg0: i32) -> (i32, i32) {
    %c0_i32 = arith.constant 0 : i32
    %c0_i32_0 = arith.constant 0 : i32
    %c0_i32_1 = arith.constant 0 : i32
    return %c0_i32, %c0_i32_0 : i32, i32
  }
  func.func @transform_6(%arg0: i32) -> (i32, i32) {
    %c0_i32 = arith.constant 0 : i32
    %c0_i32_0 = arith.constant 0 : i32
    %c0_i32_1 = arith.constant 0 : i32
    return %c0_i32, %c0_i32_0 : i32, i32
  }
  func.func @transform_7(%arg0: i32) -> (i32, i32) {
    %c0_i32 = arith.constant 0 : i32
    %c0_i32_0 = arith.constant 0 : i32
    return %arg0, %c0_i32 : i32, i32
  }
  func.func @transform_8(%arg0: i32) -> (i32, i32) {
    %c0_i32 = arith.constant 0 : i32
    %c0_i32_0 = arith.constant 0 : i32
    return %arg0, %c0_i32 : i32, i32
  }
}

</mosaic_0001>

<llo_original>
// kernel: tpu_custom_call.1
$region0: #{tpu_custom_call.1}
  #allocation0 [shape = 'u32[]', space=smem, size = 0x4, offset = 0x4, fixed_abs, tag = 'smem constant byte address 0x4 - core index']
  #allocation1 [shape = 'u32[144,128]{1,0:T(1,128)}', space=vmem, size = 0x12000, scoped, tag = 'internal scratch']
  %s0 = inlined_call_operand.hbm [shape: f32[8,16], index: 0, kind: input, shape index: {}]
  %s1 = inlined_call_operand.hbm [shape: f32[16,128], index: 1, kind: input, shape index: {}]
  %s2 = inlined_call_operand.vmem [shape: f32[1,128], index: 2, kind: input, shape index: {}]
  %s3 = inlined_call_operand.hbm [shape: f32[128,128], index: 3, kind: input, shape index: {}]
  %s4 = inlined_call_operand.vmem [shape: f32[1,128], index: 4, kind: input, shape index: {}]
  %s5 = inlined_call_operand.hbm [shape: f32[128,128], index: 5, kind: input, shape index: {}]
  %s6 = inlined_call_operand.vmem [shape: f32[1,128], index: 6, kind: input, shape index: {}]
  %s7 = inlined_call_operand.hbm [shape: f32[8,7], index: 7, kind: output, shape index: {0}]
  %s8 = inlined_call_operand.vmem [shape: f32[8,1], index: 8, kind: output, shape index: {1}]
  %9 = xla_tuple %s7, %s8
  %s10 = sld [smem:[#allocation0]]
  $region62: #{tpu_custom_call.1} parent=0
    _
  %s12 = ssub.s32 1, %s10
  %s13 = scalar_select 0, %s12, %s10
  $region1: #{tpu_custom_call.1} parent=0
    #allocation2 [shape = 'u8[4096]{0}', space=vmem, size = 0x1000, scoped, tag = 'input window, operand 0, single buffered']
    #allocation3 [shape = 's32[1]{0}', space=sflag, size = 0x4, scoped, tag = 'scoped memory for tpu_custom_call.1']
    #allocation4 [shape = 's32[1]{0}', space=sflag, size = 0x4, scoped, tag = 'scoped memory for tpu_custom_call.1']
    #allocation5 [shape = 'u8[8192]{0}', space=vmem, size = 0x2000, scoped, tag = 'input window, operand 1, single buffered']
    #allocation6 [shape = 's32[1]{0}', space=sflag, size = 0x4, scoped, tag = 'scoped memory for tpu_custom_call.1']
    #allocation7 [shape = 'u8[65536]{0}', space=vmem, size = 0x10000, scoped, tag = 'input window, operand 3, single buffered']
    #allocation8 [shape = 'u8[65536]{0}', space=vmem, size = 0x10000, scoped, tag = 'input window, operand 5, single buffered']
    #allocation9 [shape = 's32[1]{0}', space=sflag, size = 0x4, scoped, tag = 'scoped memory for tpu_custom_call.1']
    #allocation10 [shape = 'u8[4096]{0}', space=vmem, size = 0x1000, scoped, tag = 'output window, operand 0, single buffered']
    %14 = vsyncpa [#allocation3], 0
    %15 = vsyncpa [#allocation6], 0
    %16 = vsyncpa [#allocation9], 0
    %17 = vsyncpa [#allocation4], 0
    // Predicated region
    $region2: #{tpu_custom_call.1} parent=1 // pred_check
      _
    $region3: #{tpu_custom_call.1} parent=1 // pred_check_branch
      %19 = sbr.rel (0) target = $region5
    $region4: #{tpu_custom_call.1} parent=1 // pred_region
      %s21 = ssub.s32 128, 128
      %22 = vsyncadd [#allocation3], %s21
      %s24 = sshll.u32 [#allocation2], 4
      %s25 = int_to_ptr.vmem [resolvable:$true] %s24
      %27 = dma.hbm_to_vmem [thread:$0]  %s0, 128, %s25, [#allocation3]
    $region5: #{tpu_custom_call.1} parent=1 // pred_fallthru
      _
    // Predicated region
    $region6: #{tpu_custom_call.1} parent=1 // pred_check
      _
    $region7: #{tpu_custom_call.1} parent=1 // pred_check_branch
      %29 = sbr.rel (0) target = $region9
    $region8: #{tpu_custom_call.1} parent=1 // pred_region
      %s31 = ssub.s32 256, 256
      %32 = vsyncadd [#allocation6], %s31
      %s33 = sshll.u32 [#allocation5], 4
      %s34 = int_to_ptr.vmem [resolvable:$true] %s33
      %39 = dma.hbm_to_vmem [thread:$0]  %s1, 256, %s34, [#allocation6], 128, 128, 8
    $region9: #{tpu_custom_call.1} parent=1 // pred_fallthru
      _
    // Predicated region
    $region10: #{tpu_custom_call.1} parent=1 // pred_check
      _
    $region11: #{tpu_custom_call.1} parent=1 // pred_check_branch
      %41 = sbr.rel (0) target = $region13
    $region12: #{tpu_custom_call.1} parent=1 // pred_region
      _
    $region13: #{tpu_custom_call.1} parent=1 // pred_fallthru
      _
    // Predicated region
    $region14: #{tpu_custom_call.1} parent=1 // pred_check
      _
    $region15: #{tpu_custom_call.1} parent=1 // pred_check_branch
      %43 = sbr.rel (0) target = $region17
    $region16: #{tpu_custom_call.1} parent=1 // pred_region
      %s45 = ssub.s32 2048, 2048
      %46 = vsyncadd [#allocation6], %s45
      %s47 = sshll.u32 [#allocation7], 4
      %s48 = int_to_ptr.vmem [resolvable:$true] %s47
      %53 = dma.hbm_to_vmem [thread:$0]  %s3, 2048, %s48, [#allocation6], 128, 128, 8
    $region17: #{tpu_custom_call.1} parent=1 // pred_fallthru
      _
    // Predicated region
    $region18: #{tpu_custom_call.1} parent=1 // pred_check
      _
    $region19: #{tpu_custom_call.1} parent=1 // pred_check_branch
      %55 = sbr.rel (0) target = $region21
    $region20: #{tpu_custom_call.1} parent=1 // pred_region
      _
    $region21: #{tpu_custom_call.1} parent=1 // pred_fallthru
      _
    // Predicated region
    $region22: #{tpu_custom_call.1} parent=1 // pred_check
      _
    $region23: #{tpu_custom_call.1} parent=1 // pred_check_branch
      %57 = sbr.rel (0) target = $region25
    $region24: #{tpu_custom_call.1} parent=1 // pred_region
      %s59 = ssub.s32 2048, 2048
      %60 = vsyncadd [#allocation9], %s59
      %s61 = sshll.u32 [#allocation8], 4
      %s62 = int_to_ptr.vmem [resolvable:$true] %s61
      %67 = dma.hbm_to_vmem [thread:$0]  %s5, 2048, %s62, [#allocation9], 128, 128, 8
    $region25: #{tpu_custom_call.1} parent=1 // pred_fallthru
      _
    // Predicated region
    $region26: #{tpu_custom_call.1} parent=1 // pred_check
      _
    $region27: #{tpu_custom_call.1} parent=1 // pred_check_branch
      %69 = sbr.rel (0) target = $region29
    $region28: #{tpu_custom_call.1} parent=1 // pred_region
      _
    $region29: #{tpu_custom_call.1} parent=1 // pred_fallthru
      _
    // Predicated region
    $region30: #{tpu_custom_call.1} parent=1 // pred_check
      _
    $region31: #{tpu_custom_call.1} parent=1 // pred_check_branch
      %71 = sbr.rel (0) target = $region33
    $region32: #{tpu_custom_call.1} parent=1 // pred_region
      %72 = dma.done [#allocation3], 128
    $region33: #{tpu_custom_call.1} parent=1 // pred_fallthru
      _
    // Predicated region
    $region34: #{tpu_custom_call.1} parent=1 // pred_check
      _
    $region35: #{tpu_custom_call.1} parent=1 // pred_check_branch
      %74 = sbr.rel (0) target = $region37
    $region36: #{tpu_custom_call.1} parent=1 // pred_region
      %75 = dma.done [#allocation6], 256
    $region37: #{tpu_custom_call.1} parent=1 // pred_fallthru
      _
    // Predicated region
    $region38: #{tpu_custom_call.1} parent=1 // pred_check
      _
    $region39: #{tpu_custom_call.1} parent=1 // pred_check_branch
      %77 = sbr.rel (0) target = $region41
    $region40: #{tpu_custom_call.1} parent=1 // pred_region
      %78 = dma.done [#allocation6], 2048
    $region41: #{tpu_custom_call.1} parent=1 // pred_fallthru
      _
    // Predicated region
    $region42: #{tpu_custom_call.1} parent=1 // pred_check
      _
    $region43: #{tpu_custom_call.1} parent=1 // pred_check_branch
      %80 = sbr.rel (0) target = $region45
    $region44: #{tpu_custom_call.1} parent=1 // pred_region
      %81 = dma.done [#allocation9], 2048
    $region45: #{tpu_custom_call.1} parent=1 // pred_fallthru
      _
    %v82 = vld [vmem:[#allocation2] sm:$0xff]
    %v83 = vld [vmem:[#allocation5] sm:$0xff]
    %v84 = vld [vmem:[#allocation5 + $0x8] sm:$0xff]
    %v85 = vld [vmem:[%s2] sm:$0x1]
    %v87 = vlaneseq
    %v88 = vshrl.u32 %v87, 7
    %v89 = vsub.s32 0, %v88
    %v90 = vrot.slane %v85, %v89
    %vm92 = vcmask 130048
    %v94 = vsel %vm92, %v82, 0
    %96 = vmatprep.subr.mxu0 0.0
    %97 = vmatpush1.msra.mxu0 0.0
    %98 = vmatprep.subr.mxu0 0.0
    %99 = vmatpush1.msra.mxu0 0.0
    %100 = vmatprep.subr.mxu0 0.0
    %101 = vmatpush1.msra.mxu0 0.0
    %102 = vmatprep.subr.mxu0 0.0
    %103 = vmatpush1.msra.mxu0 0.0
    %104 = vmatprep.subr.mxu0 0.0
    %105 = vmatpush1.msra.mxu0 0.0
    %106 = vmatprep.subr.mxu0 0.0
    %107 = vmatpush1.msra.mxu0 0.0
    %108 = vmatprep.subr.mxu0 0.0
    %109 = vmatpush1.msra.mxu0 0.0
    %110 = vmatprep.subr.mxu0 0.0
    %111 = vmatpush1.msra.mxu0 0.0
    %112 = vmatprep.subr.mxu0 0.0
    %113 = vmatpush1.msra.mxu0 0.0
    %114 = vmatprep.subr.mxu0 0.0
    %115 = vmatpush1.msra.mxu0 0.0
    %116 = vmatprep.subr.mxu0 0.0
    %117 = vmatpush1.msra.mxu0 0.0
    %118 = vmatprep.subr.mxu0 0.0
    %119 = vmatpush1.msra.mxu0 0.0
    %120 = vmatprep.subr.mxu0 0.0
    %121 = vmatpush1.msra.mxu0 0.0
    %122 = vmatprep.subr.mxu0 0.0
    %123 = vmatpush1.msra.mxu0 0.0
    %124 = vmatprep.subr.mxu0 0.0
    %125 = vmatpush1.msra.mxu0 %v84
    %126 = vmatprep.subr.mxu0 0.0
    %127 = vmatpush1.msra.mxu0 %v83
    %128 = vmatprep.subr.mxu0 0.0
    %129 = vmatpush2.msra.mxu0 0.0
    %130 = vmatprep.subr.mxu0 0.0
    %131 = vmatpush2.msra.mxu0 0.0
    %132 = vmatprep.subr.mxu0 0.0
    %133 = vmatpush2.msra.mxu0 0.0
    %134 = vmatprep.subr.mxu0 0.0
    %135 = vmatpush2.msra.mxu0 0.0
    %136 = vmatprep.subr.mxu0 0.0
    %137 = vmatpush2.msra.mxu0 0.0
    %138 = vmatprep.subr.mxu0 0.0
    %139 = vmatpush2.msra.mxu0 0.0
    %140 = vmatprep.subr.mxu0 0.0
    %141 = vmatpush2.msra.mxu0 0.0
    %142 = vmatprep.subr.mxu0 0.0
    %143 = vmatpush2.msra.mxu0 0.0
    %144 = vmatprep.subr.mxu0 0.0
    %145 = vmatpush2.msra.mxu0 0.0
    %146 = vmatprep.subr.mxu0 0.0
    %147 = vmatpush2.msra.mxu0 0.0
    %148 = vmatprep.subr.mxu0 0.0
    %149 = vmatpush2.msra.mxu0 0.0
    %150 = vmatprep.subr.mxu0 0.0
    %151 = vmatpush2.msra.mxu0 0.0
    %152 = vmatprep.subr.mxu0 0.0
    %153 = vmatpush2.msra.mxu0 0.0
    %154 = vmatprep.subr.mxu0 0.0
    %155 = vmatpush2.msra.mxu0 0.0
    %156 = vmatprep.subr.mxu0 0.0
    %157 = vmatpush2.msra.mxu0 0.0
    %158 = vmatprep.subr.mxu0 0.0
    %159 = vmatpush2.msra.mxu0 0.0
    %160 = vmatprep.mubr.f32.mxu0 0.0
    %161 = vmatmul.mubr.f32.gmra.mxu0 %v94
    %v162 = vpop.f32.mrf.mxu0
    %v163 = vadd.f32 %v90, %v162
    %v164 = vpop.f32.mrf.mxu0
    %165 = vdwg.mxu0
    %v166 = vmax.f32 %v163, 0.0
    %v167 = vld [vmem:[#allocation7] sm:$0xff]
    %v168 = vld [vmem:[#allocation7 + $0x8] sm:$0xff]
    %v169 = vld [vmem:[#allocation7 + $0x10] sm:$0xff]
    %v170 = vld [vmem:[#allocation7 + $0x18] sm:$0xff]
    %v171 = vld [vmem:[#allocation7 + $0x20] sm:$0xff]
    %v172 = vld [vmem:[#allocation7 + $0x28] sm:$0xff]
    %v173 = vld [vmem:[#allocation7 + $0x30] sm:$0xff]
    %v174 = vld [vmem:[#allocation7 + $0x38] sm:$0xff]
    %v175 = vld [vmem:[#allocation7 + $0x40] sm:$0xff]
    %v176 = vld [vmem:[#allocation7 + $0x48] sm:$0xff]
    %v177 = vld [vmem:[#allocation7 + $0x50] sm:$0xff]
    %v178 = vld [vmem:[#allocation7 + $0x58] sm:$0xff]
    %v179 = vld [vmem:[#allocation7 + $0x60] sm:$0xff]
    %v180 = vld [vmem:[#allocation7 + $0x68] sm:$0xff]
    %v181 = vld [vmem:[#allocation7 + $0x70] sm:$0xff]
    %v182 = vld [vmem:[#allocation7 + $0x78] sm:$0xff]
    %v183 = vld [vmem:[%s4] sm:$0x1]
    %v185 = vlaneseq
    %v186 = vshrl.u32 %v185, 7
    %v187 = vsub.s32 0, %v186
    %v188 = vrot.slane %v183, %v187
    %190 = vmatprep.subr.mxu0 0.0
    %191 = vmatpush1.msra.mxu0 %v182
    %192 = vmatprep.subr.mxu0 0.0
    %193 = vmatpush1.msra.mxu0 %v181
    %194 = vmatprep.subr.mxu0 0.0
    %195 = vmatpush1.msra.mxu0 %v180
    %196 = vmatprep.subr.mxu0 0.0
    %197 = vmatpush1.msra.mxu0 %v179
    %198 = vmatprep.subr.mxu0 0.0
    %199 = vmatpush1.msra.mxu0 %v178
    %200 = vmatprep.subr.mxu0 0.0
    %201 = vmatpush1.msra.mxu0 %v177
    %202 = vmatprep.subr.mxu0 0.0
    %203 = vmatpush1.msra.mxu0 %v176
    %204 = vmatprep.subr.mxu0 0.0
    %205 = vmatpush1.msra.mxu0 %v175
    %206 = vmatprep.subr.mxu0 0.0
    %207 = vmatpush1.msra.mxu0 %v174
    %208 = vmatprep.subr.mxu0 0.0
    %209 = vmatpush1.msra.mxu0 %v173
    %210 = vmatprep.subr.mxu0 0.0
    %211 = vmatpush1.msra.mxu0 %v172
    %212 = vmatprep.subr.mxu0 0.0
    %213 = vmatpush1.msra.mxu0 %v171
    %214 = vmatprep.subr.mxu0 0.0
    %215 = vmatpush1.msra.mxu0 %v170
    %216 = vmatprep.subr.mxu0 0.0
    %217 = vmatpush1.msra.mxu0 %v169
    %218 = vmatprep.subr.mxu0 0.0
    %219 = vmatpush1.msra.mxu0 %v168
    %220 = vmatprep.subr.mxu0 0.0
    %221 = vmatpush1.msra.mxu0 %v167
    %222 = vmatprep.subr.mxu0 0.0
    %223 = vmatpush2.msra.mxu0 0.0
    %224 = vmatprep.subr.mxu0 0.0
    %225 = vmatpush2.msra.mxu0 0.0
    %226 = vmatprep.subr.mxu0 0.0
    %227 = vmatpush2.msra.mxu0 0.0
    %228 = vmatprep.subr.mxu0 0.0
    %229 = vmatpush2.msra.mxu0 0.0
    %230 = vmatprep.subr.mxu0 0.0
    %231 = vmatpush2.msra.mxu0 0.0
    %232 = vmatprep.subr.mxu0 0.0
    %233 = vmatpush2.msra.mxu0 0.0
    %234 = vmatprep.subr.mxu0 0.0
    %235 = vmatpush2.msra.mxu0 0.0
    %236 = vmatprep.subr.mxu0 0.0
    %237 = vmatpush2.msra.mxu0 0.0
    %238 = vmatprep.subr.mxu0 0.0
    %239 = vmatpush2.msra.mxu0 0.0
    %240 = vmatprep.subr.mxu0 0.0
    %241 = vmatpush2.msra.mxu0 0.0
    %242 = vmatprep.subr.mxu0 0.0
    %243 = vmatpush2.msra.mxu0 0.0
    %244 = vmatprep.subr.mxu0 0.0
    %245 = vmatpush2.msra.mxu0 0.0
    %246 = vmatprep.subr.mxu0 0.0
    %247 = vmatpush2.msra.mxu0 0.0
    %248 = vmatprep.subr.mxu0 0.0
    %249 = vmatpush2.msra.mxu0 0.0
    %250 = vmatprep.subr.mxu0 0.0
    %251 = vmatpush2.msra.mxu0 0.0
    %252 = vmatprep.subr.mxu0 0.0
    %253 = vmatpush2.msra.mxu0 0.0
    %254 = vmatprep.mubr.f32.mxu0 0.0
    %255 = vmatmul.mubr.f32.gmra.mxu0 %v166
    %v256 = vpop.f32.mrf.mxu0
    %v257 = vadd.f32 %v188, %v256
    %v258 = vpop.f32.mrf.mxu0
    %259 = vdwg.mxu0
    %v260 = vmax.f32 %v257, 0.0
    %v261 = vld [vmem:[#allocation8] sm:$0xff]
    %v262 = vld [vmem:[#allocation8 + $0x8] sm:$0xff]
    %v263 = vld [vmem:[#allocation8 + $0x10] sm:$0xff]
    %v264 = vld [vmem:[#allocation8 + $0x18] sm:$0xff]
    %v265 = vld [vmem:[#allocation8 + $0x20] sm:$0xff]
    %v266 = vld [vmem:[#allocation8 + $0x28] sm:$0xff]
    %v267 = vld [vmem:[#allocation8 + $0x30] sm:$0xff]
    %v268 = vld [vmem:[#allocation8 + $0x38] sm:$0xff]
    %v269 = vld [vmem:[#allocation8 + $0x40] sm:$0xff]
    %v270 = vld [vmem:[#allocation8 + $0x48] sm:$0xff]
    %v271 = vld [vmem:[#allocation8 + $0x50] sm:$0xff]
    %v272 = vld [vmem:[#allocation8 + $0x58] sm:$0xff]
    %v273 = vld [vmem:[#allocation8 + $0x60] sm:$0xff]
    %v274 = vld [vmem:[#allocation8 + $0x68] sm:$0xff]
    %v275 = vld [vmem:[#allocation8 + $0x70] sm:$0xff]
    %v276 = vld [vmem:[#allocation8 + $0x78] sm:$0xff]
    %v277 = vld [vmem:[%s6] sm:$0x1]
    %v279 = vlaneseq
    %v280 = vshrl.u32 %v279, 7
    %v281 = vsub.s32 0, %v280
    %v282 = vrot.slane %v277, %v281
    %284 = vmatprep.subr.mxu0 0.0
    %285 = vmatpush1.msra.mxu0 %v276
    %286 = vmatprep.subr.mxu0 0.0
    %287 = vmatpush1.msra.mxu0 %v275
    %288 = vmatprep.subr.mxu0 0.0
    %289 = vmatpush1.msra.mxu0 %v274
    %290 = vmatprep.subr.mxu0 0.0
    %291 = vmatpush1.msra.mxu0 %v273
    %292 = vmatprep.subr.mxu0 0.0
    %293 = vmatpush1.msra.mxu0 %v272
    %294 = vmatprep.subr.mxu0 0.0
    %295 = vmatpush1.msra.mxu0 %v271
    %296 = vmatprep.subr.mxu0 0.0
    %297 = vmatpush1.msra.mxu0 %v270
    %298 = vmatprep.subr.mxu0 0.0
    %299 = vmatpush1.msra.mxu0 %v269
    %300 = vmatprep.subr.mxu0 0.0
    %301 = vmatpush1.msra.mxu0 %v268
    %302 = vmatprep.subr.mxu0 0.0
    %303 = vmatpush1.msra.mxu0 %v267
    %304 = vmatprep.subr.mxu0 0.0
    %305 = vmatpush1.msra.mxu0 %v266
    %306 = vmatprep.subr.mxu0 0.0
    %307 = vmatpush1.msra.mxu0 %v265
    %308 = vmatprep.subr.mxu0 0.0
    %309 = vmatpush1.msra.mxu0 %v264
    %310 = vmatprep.subr.mxu0 0.0
    %311 = vmatpush1.msra.mxu0 %v263
    %312 = vmatprep.subr.mxu0 0.0
    %313 = vmatpush1.msra.mxu0 %v262
    %314 = vmatprep.subr.mxu0 0.0
    %315 = vmatpush1.msra.mxu0 %v261
    %316 = vmatprep.subr.mxu0 0.0
    %317 = vmatpush2.msra.mxu0 0.0
    %318 = vmatprep.subr.mxu0 0.0
    %319 = vmatpush2.msra.mxu0 0.0
    %320 = vmatprep.subr.mxu0 0.0
    %321 = vmatpush2.msra.mxu0 0.0
    %322 = vmatprep.subr.mxu0 0.0
    %323 = vmatpush2.msra.mxu0 0.0
    %324 = vmatprep.subr.mxu0 0.0
    %325 = vmatpush2.msra.mxu0 0.0
    %326 = vmatprep.subr.mxu0 0.0
    %327 = vmatpush2.msra.mxu0 0.0
    %328 = vmatprep.subr.mxu0 0.0
    %329 = vmatpush2.msra.mxu0 0.0
    %330 = vmatprep.subr.mxu0 0.0
    %331 = vmatpush2.msra.mxu0 0.0
    %332 = vmatprep.subr.mxu0 0.0
    %333 = vmatpush2.msra.mxu0 0.0
    %334 = vmatprep.subr.mxu0 0.0
    %335 = vmatpush2.msra.mxu0 0.0
    %336 = vmatprep.subr.mxu0 0.0
    %337 = vmatpush2.msra.mxu0 0.0
    %338 = vmatprep.subr.mxu0 0.0
    %339 = vmatpush2.msra.mxu0 0.0
    %340 = vmatprep.subr.mxu0 0.0
    %341 = vmatpush2.msra.mxu0 0.0
    %342 = vmatprep.subr.mxu0 0.0
    %343 = vmatpush2.msra.mxu0 0.0
    %344 = vmatprep.subr.mxu0 0.0
    %345 = vmatpush2.msra.mxu0 0.0
    %346 = vmatprep.subr.mxu0 0.0
    %347 = vmatpush2.msra.mxu0 0.0
    %348 = vmatprep.mubr.f32.mxu0 0.0
    %349 = vmatmul.mubr.f32.gmra.mxu0 %v260
    %v350 = vpop.f32.mrf.mxu0
    %v351 = vadd.f32 %v282, %v350
    %v352 = vpop.f32.mrf.mxu0
    %353 = vdwg.mxu0
    %v354 = vlaneseq
    %v355 = vand.u32 %v354, 127
    %vm356 = vcmp.lt.s32.totalorder %v355, 4
    %vm357 = vcmp.ge.s32.totalorder %v355, 4
    %vm358 = vcmp.lt.s32.totalorder %v355, 5
    %vm359 = vmand %vm357, %vm358
    %v360 = vsel %vm356, 1, 0
    %vm361 = vcmp.eq.s32.totalorder %v360, 1
    %v362 = vsel %vm361, %v351, -inf
    %363 = vmax.xlane.f32.xlu0 %v362
    %v364 = vpop.xlane.xlu0 %363
    %v365 = vsub.f32 %v362, %v364
    %v366 = vmul.f32 %v365, 1.442695
    %v367 = vpow.pop %v366
    %368 = vadd.xlane.f32.xlu0 %v367
    %v369 = vpop.xlane.xlu0 %368
    %v370 = vrcp.pop %v369
    %v371 = vmul.f32 %v367, %v370
    %v372 = vmul.f32 %v351, 10.0
    %v373 = vtanh.pop %v372
    %vm374 = vcmp.ge.f32.partialorder %v351, 0.0
    %v375 = vmul.f32 %v351, 0.01
    %v376 = vsel %vm374, %v351, %v375
    %v377 = vsel %vm359, 1, 0
    %vm378 = vcmp.eq.s32.totalorder %v377, 1
    %v379 = vsel %vm378, %v373, %v376
    %v380 = vsel %vm361, %v371, %v379
    %vm381 = vcmask 56320
    %382 = vst.msk [vmem:[#allocation10] sm:$0xff] %vm381, %v380
    %384 = vrot.lane.b32.xlu0 %v351, 121
    %v385 = vpop.permute.xlu0 %384
    %vm387 = vcmask 7168
    %388 = vst.msk [vmem:[%s8] sm:$0xff] %vm387, %v385
    // Predicated region
    $region46: #{tpu_custom_call.1} parent=1 // pred_check
      _
    $region47: #{tpu_custom_call.1} parent=1 // pred_check_branch
      %390 = sbr.rel (0) target = $region49
    $region48: #{tpu_custom_call.1} parent=1 // pred_region
      %s392 = ssub.s32 128, 128
      %393 = vsyncadd [#allocation4], %s392
      %s395 = sshll.u32 [#allocation10], 4
      %s396 = int_to_ptr.vmem [resolvable:$true] %s395
      %398 = dma.vmem_to_hbm [thread:$0]  %s396, 128, %s7, [#allocation4]
    $region49: #{tpu_custom_call.1} parent=1 // pred_fallthru
      _
    // Predicated region
    $region50: #{tpu_custom_call.1} parent=1 // pred_check
      _
    $region51: #{tpu_custom_call.1} parent=1 // pred_check_branch
      %400 = sbr.rel (0) target = $region53
    $region52: #{tpu_custom_call.1} parent=1 // pred_region
      _
    $region53: #{tpu_custom_call.1} parent=1 // pred_fallthru
      _
    // Predicated region
    $region54: #{tpu_custom_call.1} parent=1 // pred_check
      _
    $region55: #{tpu_custom_call.1} parent=1 // pred_check_branch
      %402 = sbr.rel (0) target = $region57
    $region56: #{tpu_custom_call.1} parent=1 // pred_region
      %403 = dma.done [#allocation4], 128
    $region57: #{tpu_custom_call.1} parent=1 // pred_fallthru
      _
    // Predicated region
    $region58: #{tpu_custom_call.1} parent=1 // pred_check
      _
    $region59: #{tpu_custom_call.1} parent=1 // pred_check_branch
      %405 = sbr.rel (0) target = $region61
    $region60: #{tpu_custom_call.1} parent=1 // pred_region
      _
    $region61: #{tpu_custom_call.1} parent=1 // pred_fallthru
      _
    %406 = vsyncpa [#allocation3], 1
    %407 = vsyncpa [#allocation6], 1
    %408 = vsyncpa [#allocation9], 1
    %409 = vsyncpa [#allocation4], 1

</llo_original>
